<compile_context>
chip_gen: v5e
topology: v5e:2x2
jax: 0.10.0
libtpu: 0.0.40
codegen_flags: <defaults>
</compile_context>

<pallas_src>
import jax
import jax.numpy as jnp
from jax import lax
from jax.experimental import pallas as pl
from jax.experimental.pallas import tpu as pltpu

# ----- small, self-consistent dimensions (the original module uses 300 everywhere)
D_DEC = 32      # decoder_state_size
K_UTT = 32      # utterance attention key/value size (attention_key_size - 50)
A_UTT = 32      # additive-attention hidden size (utterance)
K_SCH = 32      # schema_attention_key_size
A_SCH = 32      # additive-attention hidden size (schema / col)
H_INT = 32      # intermediate state size
V_VOC = 16      # vocabulary size
T_UTT = 8       # number of input hidden states
N_SCHEMA = 10   # rows in schema_v
N_IDS = 4       # len(id_list)
N_COLS = 6      # len(schema_states)
IN_SIZE = D_DEC + K_UTT + K_SCH  # self.in_size
OUT_W = 128     # single lane-dense fused output row

# ----- dense parameter-slab layout (all blocks sublane(8)/lane aligned) --------------
SLAB_COLS = 128
R_A = 0                       # rows  0:32  -> [wq_u | wq_c | W_state[:D_DEC] | wk_u]
C_WQU, C_WQC, C_W0, C_WKU = 0, 32, 64, 96
R_B = 32                      # rows 32:96  -> W12 = W_state[D_DEC:]  (64 x 32) in cols 0:32
C_W12 = 0                     # rows 32:64  -> wk_c (cols 32:64), [w_vocab|w_schema] (cols 64:112)
C_WKC = 32
C_WVOC = 64
C_WSCH = C_WVOC + V_VOC       # 80
R_VB = 96                     # row  96     -> [v_u | v_c | b_vocab]
C_VU, C_VC, C_BV = 0, 32, 64
SLAB_ROWS = R_VB + 8          # 104 rows (multiple of 8); ~52 KiB f32

_NT = (((1,), (1,)), ((), ()))   # dot_general: contract last-with-last (A @ B.T)


def _schema_token_predictor_kernel(dec_ref, khs_ref, ids_ref, schv_ref, sstates_ref,
                                   slab_ref, out_ref):
    q = dec_ref[0]                                  # (1, D_DEC)
    khs = khs_ref[0]                                # (T, K_UTT)
    ids = ids_ref[0]                                # (N_IDS, 1) int32
    schv = schv_ref[...]                            # (N_SCHEMA, K_SCH)
    t = khs.shape[0]
    n_ids = ids.shape[0]
    n_schema = schv.shape[0]
    n_cols = sstates_ref.shape[1]

    # ---- gather of schema_v rows selected by id_list: single broadcast compare -> one-hot
    col_iota = lax.broadcasted_iota(jnp.int32, (n_ids, n_schema), 1)
    onehot = (col_iota == ids).astype(jnp.float32)                          # (N_IDS, N_SCHEMA)
    colsel = jnp.dot(onehot, schv, preferred_element_type=jnp.float32)      # (N_IDS, K_SCH)

    # ---- fused q-side projections: [qh_u | qh_c | inter0] in ONE MXU pass -------------
    qh_all = jnp.dot(q, slab_ref[R_A:R_A + D_DEC, 0:A_UTT + A_SCH + H_INT],
                     preferred_element_type=jnp.float32)                    # (1, 96)
    qh_u = qh_all[:, 0:A_UTT]
    qh_c = qh_all[:, A_UTT:A_UTT + A_SCH]
    inter0 = qh_all[:, A_UTT + A_SCH:A_UTT + A_SCH + H_INT]                 # q @ W_state[:D_DEC]

    v_u = slab_ref[R_VB:R_VB + 1, C_VU:C_VU + A_UTT]                        # (1, A)
    v_c = slab_ref[R_VB:R_VB + 1, C_VC:C_VC + A_SCH]                        # (1, A)
    b_voc = slab_ref[R_VB:R_VB + 1, C_BV:C_BV + V_VOC]                      # (1, V_VOC)

    # ---------------- utterance attention (additive) -----------------------------------
    kh = jnp.dot(khs, slab_ref[R_A:R_A + K_UTT, C_WKU:C_WKU + A_UTT],
                 preferred_element_type=jnp.float32)                        # (T, A)
    e_u = lax.dot_general(v_u, jnp.tanh(qh_u + kh), _NT,
                          preferred_element_type=jnp.float32)               # (1, T)
    e_u = e_u - jnp.max(e_u, axis=-1, keepdims=True)
    w_u = jnp.exp(e_u)
    dist_u = w_u * (1.0 / jnp.sum(w_u, axis=-1, keepdims=True))             # (1, T)
    utt_vec = jnp.dot(dist_u, khs, preferred_element_type=jnp.float32)      # (1, K_UTT)

    # ---------------- schema ("col") attention over id_list-selected rows --------------
    ch = jnp.dot(colsel, slab_ref[R_B:R_B + K_SCH, C_WKC:C_WKC + A_SCH],
                 preferred_element_type=jnp.float32)                        # (N_IDS, A)
    e_c = lax.dot_general(v_c, jnp.tanh(qh_c + ch), _NT,
                          preferred_element_type=jnp.float32)               # (1, N_IDS)
    e_c = e_c - jnp.max(e_c, axis=-1, keepdims=True)
    w_c = jnp.exp(e_c)
    dist_c = w_c * (1.0 / jnp.sum(w_c, axis=-1, keepdims=True))             # (1, N_IDS)
    sch_vec = jnp.dot(dist_c, colsel, preferred_element_type=jnp.float32)   # (1, K_SCH)

    # ---- intermediate state: inter = q@W0 + [utt|sch]@W12 (register-only, no scratch) --
    uv_sv = jnp.concatenate([utt_vec, sch_vec], axis=-1)                    # (1, 2K) == c_k
    inter = inter0 + jnp.dot(uv_sv, slab_ref[R_B:R_B + K_UTT + K_SCH, C_W12:C_W12 + H_INT],
                             preferred_element_type=jnp.float32)            # (1, H_INT)

    # ---- fused vocabulary + schema-token-scorer projection (one MXU pass) -------------
    vs = jnp.dot(inter, slab_ref[R_B:R_B + H_INT, C_WVOC:C_WVOC + V_VOC + K_SCH],
                 preferred_element_type=jnp.float32)                        # (1, V_VOC+K_SCH)
    vocab = vs[:, 0:V_VOC] + b_voc
    scorer = vs[:, V_VOC:V_VOC + K_SCH]                                     # (1, K_SCH)
    schema_scores = jnp.dot(scorer, sstates_ref[...],
                            preferred_element_type=jnp.float32)             # (1, N_COLS)

    # ---- ONE lane-dense 128-wide output row, assembled in registers, single store -----
    pad_w = OUT_W - (V_VOC + n_cols + K_UTT + K_SCH + t)
    pad = jnp.zeros((1, pad_w), jnp.float32)
    out_ref[0] = jnp.concatenate([vocab, schema_scores, uv_sv, dist_u, pad], axis=-1)


@jax.jit
def schema_token_predictor_forward(param_slab, decoder_state, input_hidden_states,
                                   schema_v, schema_states, id_idx):
    """Batched forward. Shapes:
         decoder_state        (B, 1, D_DEC)
         input_hidden_states  (B, T, K_UTT)
         id_idx               (B, N_IDS) int32
         schema_v             (N_SCHEMA, K_SCH)   (shared across the batch)
         schema_states        (K_SCH, N_COLS)     (shared; torch.stack(schema_states, 1))
       Returns (final_scores, c_k, utt_vec, utt_dist, sch_vec), each with leading dim B."""
    b = decoder_state.shape[0]
    t = input_hidden_states.shape[1]
    n_ids = id_idx.shape[1]
    n_cols = schema_states.shape[1]
    assert V_VOC + n_cols + K_UTT + K_SCH + t <= OUT_W

    ids3 = id_idx.astype(jnp.int32)[..., None]                  # (B, N_IDS, 1) -> tiny VMEM input

    # Rough advisory cost for XLA's scheduler around the tiny custom call.
    flops_step = 2 * (D_DEC * (A_UTT + A_SCH + H_INT) + t * K_UTT * A_UTT
                      + n_ids * N_SCHEMA * K_SCH + n_ids * K_SCH * A_SCH
                      + A_UTT * t + A_SCH * n_ids + t * K_UTT + n_ids * K_SCH
                      + (K_UTT + K_SCH) * H_INT + H_INT * (V_VOC + K_SCH) + K_SCH * n_cols)
    bytes_step = 4 * (D_DEC + t * K_UTT + n_ids + OUT_W)
    cost = pl.CostEstimate(
        flops=b * flops_step,
        transcendentals=b * ((t + n_ids) * A_UTT + t + n_ids),
        bytes_accessed=4 * (param_slab.size + schema_v.size + schema_states.size) + b * bytes_step)

    grid_spec = pltpu.PrefetchScalarGridSpec(
        num_scalar_prefetch=0,
        grid=(b,),
        in_specs=[
            pl.BlockSpec((1, 1, D_DEC), lambda i: (i, 0, 0)),          # decoder_state (per step)
            pl.BlockSpec((1, t, K_UTT), lambda i: (i, 0, 0)),          # input_hidden_states
            pl.BlockSpec((1, n_ids, 1), lambda i: (i, 0, 0)),          # ids (per step)
            pl.BlockSpec(schema_v.shape, lambda i: (0, 0)),            # VMEM-resident across grid
            pl.BlockSpec(schema_states.shape, lambda i: (0, 0)),       # VMEM-resident
            pl.BlockSpec(param_slab.shape, lambda i: (0, 0)),          # single parameter DMA
        ],
        out_specs=pl.BlockSpec((1, 1, OUT_W), lambda i: (i, 0, 0)),
    )

    out = pl.pallas_call(
        _schema_token_predictor_kernel,
        grid_spec=grid_spec,
        out_shape=jax.ShapeDtypeStruct((b, 1, OUT_W), jnp.float32),
        compiler_params=pltpu.CompilerParams(dimension_semantics=("parallel",)),
        cost_estimate=cost,
    )(decoder_state, input_hidden_states, ids3, schema_v, schema_states, param_slab)

    row = out[:, 0, :]                                           # (B, 128)
    o_utt = V_VOC + n_cols
    o_sch = o_utt + K_UTT
    o_dist = o_sch + K_SCH
    final_scores = row[:, 0:V_VOC + n_cols]
    utt_vec = row[:, o_utt:o_utt + K_UTT]
    sch_vec = row[:, o_sch:o_sch + K_SCH]
    c_k = row[:, o_utt:o_dist]                                   # contiguous: no concat needed
    utt_dist = row[:, o_dist:o_dist + t]
    return final_scores, c_k, utt_vec, utt_dist, sch_vec


def pack_params(params):
    """One-time (outside jit) dense packing of the 10 small parameter tensors into a
    single lane-aligned f32 slab (104 x 128, ~52 KiB) -> ONE parameter DMA per call."""
    slab = jnp.zeros((SLAB_ROWS, SLAB_COLS), jnp.float32)
    # row group A: [wq_u | wq_c | W_state[:D_DEC] | wk_u]
    slab = slab.at[R_A:R_A + D_DEC, C_WQU:C_WQU + A_UTT].set(params["wq_u"])
    slab = slab.at[R_A:R_A + D_DEC, C_WQC:C_WQC + A_SCH].set(params["wq_c"])
    slab = slab.at[R_A:R_A + D_DEC, C_W0:C_W0 + H_INT].set(params["w_state"][0:D_DEC])
    slab = slab.at[R_A:R_A + K_UTT, C_WKU:C_WKU + A_UTT].set(params["wk_u"])
    # row group B: W12 (64x32), wk_c, [w_vocab | w_schema]
    slab = slab.at[R_B:R_B + K_UTT + K_SCH, C_W12:C_W12 + H_INT].set(params["w_state"][D_DEC:IN_SIZE])
    slab = slab.at[R_B:R_B + K_SCH, C_WKC:C_WKC + A_SCH].set(params["wk_c"])
    slab = slab.at[R_B:R_B + H_INT, C_WVOC:C_WVOC + V_VOC].set(params["w_vocab"])
    slab = slab.at[R_B:R_B + H_INT, C_WSCH:C_WSCH + K_SCH].set(params["w_schema"])
    # row group D: [v_u | v_c | b_vocab]
    slab = slab.at[R_VB, C_VU:C_VU + A_UTT].set(params["v_u"][0])
    slab = slab.at[R_VB, C_VC:C_VC + A_SCH].set(params["v_c"][0])
    slab = slab.at[R_VB, C_BV:C_BV + V_VOC].set(params["b_vocab"][0])
    return slab


def _reference_single(params, dec, khs, schema_v, sstates, ids):
    """Pure-JAX reference of one decode step (silent correctness check)."""
    q = dec                                                           # (1, D_DEC)
    e = jnp.sum(jnp.tanh(q @ params["wq_u"] + khs @ params["wk_u"]) * params["v_u"], -1)
    dist = jax.nn.softmax(e)
    utt = dist @ khs
    c = schema_v[ids]
    e2 = jnp.sum(jnp.tanh(q @ params["wq_c"] + c @ params["wk_c"]) * params["v_c"], -1)
    sch = jax.nn.softmax(e2) @ c
    state = jnp.concatenate([q[0], utt, sch])
    inter = state @ params["w_state"]
    vocab = inter @ params["w_vocab"] + params["b_vocab"][0]
    scorer = inter @ params["w_schema"]
    final = jnp.concatenate([vocab, scorer @ sstates])
    c_k = jnp.concatenate([utt, sch])
    return final, dist, c_k


def make_params(key):
    ks = jax.random.split(key, 11)

    def init(k, shape, scale=0.1):
        return (scale * jax.random.normal(k, shape)).astype(jnp.float32)

    return {
        "wq_u": init(ks[0], (D_DEC, A_UTT)),
        "wk_u": init(ks[1], (K_UTT, A_UTT)),
        "v_u": init(ks[2], (1, A_UTT)),
        "wq_c": init(ks[3], (D_DEC, A_SCH)),
        "wk_c": init(ks[4], (K_SCH, A_SCH)),
        "v_c": init(ks[5], (1, A_SCH)),
        "w_state": init(ks[6], (IN_SIZE, H_INT)),       # weights-state-transform_fi
        "w_vocab": init(ks[7], (H_INT, V_VOC)),         # weights-vocabulary_fi
        "b_vocab": init(ks[8], (1, V_VOC)),             # biases-vocabulary_fi
        "w_schema": init(ks[9], (H_INT, K_SCH)),        # weights-schema-token-fi
        "start_schema_vec": init(ks[10], (1, K_SCH)),   # start_schema_attention_vector_fi
    }


if __name__ == "__main__":
    root = jax.random.PRNGKey(0)
    kp, kd, kh, ksv, kss = jax.random.split(root, 5)

    B = 2                                                   # batched decode steps
    params = make_params(kp)
    param_slab = pack_params(params)                        # packed once, outside jit
    decoder_state = (0.1 * jax.random.normal(kd, (B, 1, D_DEC))).astype(jnp.float32)
    input_hidden_states = (0.1 * jax.random.normal(kh, (B, T_UTT, K_UTT))).astype(jnp.float32)
    schema_v = (0.1 * jax.random.normal(ksv, (N_SCHEMA, K_SCH))).astype(jnp.float32)
    # torch.stack(schema_states, dim=1) layout: (feature, n_cols)
    schema_states = (0.1 * jax.random.normal(kss, (K_SCH, N_COLS))).astype(jnp.float32)
    id_idx = jnp.array([[1, 3, 4, 7], [0, 2, 5, 9]], dtype=jnp.int32)  # schem_map[cn] per step

    outs = jax.block_until_ready(
        schema_token_predictor_forward(param_slab, decoder_state, input_hidden_states,
                                       schema_v, schema_states, id_idx))
    final_scores, c_k, utt_vec, utt_dist, sch_vec = outs

    assert final_scores.shape == (B, V_VOC + N_COLS)
    assert c_k.shape == (B, K_UTT + K_SCH)
    for bi in range(B):
        ref_scores, ref_dist, ref_ck = _reference_single(
            params, decoder_state[bi], input_hidden_states[bi], schema_v, schema_states,
            id_idx[bi])
        assert jnp.allclose(final_scores[bi], ref_scores, atol=1e-4, rtol=1e-4)
        assert jnp.allclose(utt_dist[bi], ref_dist, atol=1e-4, rtol=1e-4)
        assert jnp.allclose(c_k[bi], ref_ck, atol=1e-4, rtol=1e-4)

    print("KERNEL_OK")
</pallas_src>

<mosaic_0001>
module attributes {stable_mosaic.version = 11 : i64} {
  func.func @_schema_token_predictor_kernel(%arg0: i32, %arg1: memref<1x1x32xf32, #tpu.memory_space<vmem>>, %arg2: memref<1x8x32xf32, #tpu.memory_space<vmem>>, %arg3: memref<1x4x1xi32, #tpu.memory_space<vmem>>, %arg4: memref<10x32xf32, #tpu.memory_space<vmem>>, %arg5: memref<32x6xf32, #tpu.memory_space<vmem>>, %arg6: memref<104x128xf32, #tpu.memory_space<vmem>>, %arg7: memref<1x1x128xf32, #tpu.memory_space<vmem>>) attributes {dimension_semantics = [#tpu.dimension_semantics<parallel>], iteration_bounds = array<i64: 2>, scalar_prefetch = 0 : i64, scratch_operands = 0 : i64, tpu.core_type = #tpu.core_type<tc>, window_params = [{transform_indices = @transform_0, window_bounds = array<i64: 1, 1, 32>}, {transform_indices = @transform_1, window_bounds = array<i64: 1, 8, 32>}, {transform_indices = @transform_2, window_bounds = array<i64: 1, 4, 1>}, {pipeline_mode = #tpu.pipeline_mode<synchronous>, transform_indices = @transform_3, window_bounds = array<i64: 10, 32>}, {pipeline_mode = #tpu.pipeline_mode<synchronous>, transform_indices = @transform_4, window_bounds = array<i64: 32, 6>}, {pipeline_mode = #tpu.pipeline_mode<synchronous>, transform_indices = @transform_5, window_bounds = array<i64: 104, 128>}, {transform_indices = @transform_6, window_bounds = array<i64: 1, 1, 128>}]} {
    %c0 = arith.constant 0 : index
    %c0_0 = arith.constant 0 : index
    %c0_1 = arith.constant 0 : index
    %0 = vector.load %arg1[%c0, %c0_0, %c0_1] : memref<1x1x32xf32, #tpu.memory_space<vmem>>, vector<1x1x32xf32>
    %1 = vector.shape_cast %0 : vector<1x1x32xf32> to vector<1x32xf32>
    %c0_2 = arith.constant 0 : index
    %c0_3 = arith.constant 0 : index
    %c0_4 = arith.constant 0 : index
    %2 = vector.load %arg2[%c0_2, %c0_3, %c0_4] : memref<1x8x32xf32, #tpu.memory_space<vmem>>, vector<1x8x32xf32>
    %3 = vector.shape_cast %2 : vector<1x8x32xf32> to vector<8x32xf32>
    %c0_5 = arith.constant 0 : index
    %c0_6 = arith.constant 0 : index
    %c0_7 = arith.constant 0 : index
    %4 = vector.load %arg3[%c0_5, %c0_6, %c0_7] : memref<1x4x1xi32, #tpu.memory_space<vmem>>, vector<1x4x1xi32>
    %5 = vector.shape_cast %4 : vector<1x4x1xi32> to vector<4x1xi32>
    %c0_8 = arith.constant 0 : index
    %c0_9 = arith.constant 0 : index
    %6 = vector.load %arg4[%c0_8, %c0_9] : memref<10x32xf32, #tpu.memory_space<vmem>>, vector<10x32xf32>
    %7 = tpu.iota {dimensions = array<i32: 1>} : vector<4x10xi32>
    %8 = vector.broadcast %5 : vector<4x1xi32> to vector<4x10xi32>
    %9 = arith.cmpi eq, %7, %8 : vector<4x10xi32>
    %10 = arith.extui %9 : vector<4x10xi1> to vector<4x10xi32>
    %11 = arith.sitofp %10 : vector<4x10xi32> to vector<4x10xf32>
    %cst = arith.constant dense<0.000000e+00> : vector<4x32xf32>
    %12 = tpu.matmul %11, %6, %cst {dimension_numbers = #tpu.dot_dimension_numbers<[1], [0], [0], [1], [0, 0, 1, 1], [], []>} : vector<4x10xf32>, vector<10x32xf32>, vector<4x32xf32> -> vector<4x32xf32>
    %c0_10 = arith.constant 0 : index
    %c0_11 = arith.constant 0 : index
    %13 = vector.load %arg6[%c0_10, %c0_11] : memref<104x128xf32, #tpu.memory_space<vmem>>, vector<32x96xf32>
    %cst_12 = arith.constant dense<0.000000e+00> : vector<1x96xf32>
    %14 = tpu.matmul %1, %13, %cst_12 {dimension_numbers = #tpu.dot_dimension_numbers<[1], [0], [0], [1], [0, 0, 1, 1], [], []>} : vector<1x32xf32>, vector<32x96xf32>, vector<1x96xf32> -> vector<1x96xf32>
    %15 = vector.extract_strided_slice %14 {offsets = [0, 0], sizes = [1, 32], strides = [1, 1]} : vector<1x96xf32> to vector<1x32xf32>
    %16 = vector.extract_strided_slice %14 {offsets = [0, 32], sizes = [1, 32], strides = [1, 1]} : vector<1x96xf32> to vector<1x32xf32>
    %17 = vector.extract_strided_slice %14 {offsets = [0, 64], sizes = [1, 32], strides = [1, 1]} : vector<1x96xf32> to vector<1x32xf32>
    %c96 = arith.constant 96 : index
    %c0_13 = arith.constant 0 : index
    %18 = vector.load %arg6[%c96, %c0_13] : memref<104x128xf32, #tpu.memory_space<vmem>>, vector<1x32xf32>
    %c96_14 = arith.constant 96 : index
    %c32 = arith.constant 32 : index
    %19 = vector.load %arg6[%c96_14, %c32] : memref<104x128xf32, #tpu.memory_space<vmem>>, vector<1x32xf32>
    %c96_15 = arith.constant 96 : index
    %c64 = arith.constant 64 : index
    %20 = vector.load %arg6[%c96_15, %c64] : memref<104x128xf32, #tpu.memory_space<vmem>>, vector<1x16xf32>
    %c0_16 = arith.constant 0 : index
    %c96_17 = arith.constant 96 : index
    %21 = vector.load %arg6[%c0_16, %c96_17] : memref<104x128xf32, #tpu.memory_space<vmem>>, vector<32x32xf32>
    %cst_18 = arith.constant dense<0.000000e+00> : vector<8x32xf32>
    %22 = tpu.matmul %3, %21, %cst_18 {dimension_numbers = #tpu.dot_dimension_numbers<[1], [0], [0], [1], [0, 0, 1, 1], [], []>} : vector<8x32xf32>, vector<32x32xf32>, vector<8x32xf32> -> vector<8x32xf32>
    %23 = vector.broadcast %15 : vector<1x32xf32> to vector<8x32xf32>
    %24 = arith.addf %23, %22 : vector<8x32xf32>
    %25 = math.tanh %24 : vector<8x32xf32>
    %cst_19 = arith.constant dense<0.000000e+00> : vector<1x8xf32>
    %26 = tpu.matmul %18, %25, %cst_19 {dimension_numbers = #tpu.dot_dimension_numbers<[1], [1], [0], [0], [0, 0, 1, 0], [], []>} : vector<1x32xf32>, vector<8x32xf32>, vector<1x8xf32> -> vector<1x8xf32>
    %cst_20 = arith.constant dense<0xFF800000> : vector<1xf32>
    %27 = vector.multi_reduction <maximumf>, %26, %cst_20 [1] : vector<1x8xf32> to vector<1xf32>
    %28 = vector.shape_cast %27 : vector<1xf32> to vector<1x1xf32>
    %29 = vector.broadcast %28 : vector<1x1xf32> to vector<1x8xf32>
    %30 = arith.subf %26, %29 : vector<1x8xf32>
    %31 = math.exp %30 : vector<1x8xf32>
    %cst_21 = arith.constant dense<0.000000e+00> : vector<1xf32>
    %32 = vector.multi_reduction <add>, %31, %cst_21 [1] : vector<1x8xf32> to vector<1xf32>
    %33 = vector.shape_cast %32 : vector<1xf32> to vector<1x1xf32>
    %cst_22 = arith.constant 1.000000e+00 : f32
    %34 = vector.broadcast %cst_22 : f32 to vector<1x1xf32>
    %35 = arith.divf %34, %33 : vector<1x1xf32>
    %36 = vector.broadcast %35 : vector<1x1xf32> to vector<1x8xf32>
    %37 = arith.mulf %31, %36 : vector<1x8xf32>
    %cst_23 = arith.constant dense<0.000000e+00> : vector<1x32xf32>
    %38 = tpu.matmul %37, %3, %cst_23 {dimension_numbers = #tpu.dot_dimension_numbers<[1], [0], [0], [1], [0, 0, 1, 1], [], []>} : vector<1x8xf32>, vector<8x32xf32>, vector<1x32xf32> -> vector<1x32xf32>
    %c32_24 = arith.constant 32 : index
    %c32_25 = arith.constant 32 : index
    %39 = vector.load %arg6[%c32_24, %c32_25] : memref<104x128xf32, #tpu.memory_space<vmem>>, vector<32x32xf32>
    %cst_26 = arith.constant dense<0.000000e+00> : vector<4x32xf32>
    %40 = tpu.matmul %12, %39, %cst_26 {dimension_numbers = #tpu.dot_dimension_numbers<[1], [0], [0], [1], [0, 0, 1, 1], [], []>} : vector<4x32xf32>, vector<32x32xf32>, vector<4x32xf32> -> vector<4x32xf32>
    %41 = vector.broadcast %16 : vector<1x32xf32> to vector<4x32xf32>
    %42 = arith.addf %41, %40 : vector<4x32xf32>
    %43 = math.tanh %42 : vector<4x32xf32>
    %cst_27 = arith.constant dense<0.000000e+00> : vector<1x4xf32>
    %44 = tpu.matmul %19, %43, %cst_27 {dimension_numbers = #tpu.dot_dimension_numbers<[1], [1], [0], [0], [0, 0, 1, 0], [], []>} : vector<1x32xf32>, vector<4x32xf32>, vector<1x4xf32> -> vector<1x4xf32>
    %cst_28 = arith.constant dense<0xFF800000> : vector<1xf32>
    %45 = vector.multi_reduction <maximumf>, %44, %cst_28 [1] : vector<1x4xf32> to vector<1xf32>
    %46 = vector.shape_cast %45 : vector<1xf32> to vector<1x1xf32>
    %47 = vector.broadcast %46 : vector<1x1xf32> to vector<1x4xf32>
    %48 = arith.subf %44, %47 : vector<1x4xf32>
    %49 = math.exp %48 : vector<1x4xf32>
    %cst_29 = arith.constant dense<0.000000e+00> : vector<1xf32>
    %50 = vector.multi_reduction <add>, %49, %cst_29 [1] : vector<1x4xf32> to vector<1xf32>
    %51 = vector.shape_cast %50 : vector<1xf32> to vector<1x1xf32>
    %cst_30 = arith.constant 1.000000e+00 : f32
    %52 = vector.broadcast %cst_30 : f32 to vector<1x1xf32>
    %53 = arith.divf %52, %51 : vector<1x1xf32>
    %54 = vector.broadcast %53 : vector<1x1xf32> to vector<1x4xf32>
    %55 = arith.mulf %49, %54 : vector<1x4xf32>
    %cst_31 = arith.constant dense<0.000000e+00> : vector<1x32xf32>
    %56 = tpu.matmul %55, %12, %cst_31 {dimension_numbers = #tpu.dot_dimension_numbers<[1], [0], [0], [1], [0, 0, 1, 1], [], []>} : vector<1x4xf32>, vector<4x32xf32>, vector<1x32xf32> -> vector<1x32xf32>
    %57 = tpu.concatenate %38, %56 in 1 : vector<1x32xf32>, vector<1x32xf32> -> vector<1x64xf32>
    %c32_32 = arith.constant 32 : index
    %c0_33 = arith.constant 0 : index
    %58 = vector.load %arg6[%c32_32, %c0_33] : memref<104x128xf32, #tpu.memory_space<vmem>>, vector<64x32xf32>
    %cst_34 = arith.constant dense<0.000000e+00> : vector<1x32xf32>
    %59 = tpu.matmul %57, %58, %cst_34 {dimension_numbers = #tpu.dot_dimension_numbers<[1], [0], [0], [1], [0, 0, 1, 1], [], []>} : vector<1x64xf32>, vector<64x32xf32>, vector<1x32xf32> -> vector<1x32xf32>
    %60 = arith.addf %17, %59 : vector<1x32xf32>
    %c32_35 = arith.constant 32 : index
    %c64_36 = arith.constant 64 : index
    %61 = vector.load %arg6[%c32_35, %c64_36] : memref<104x128xf32, #tpu.memory_space<vmem>>, vector<32x48xf32>
    %cst_37 = arith.constant dense<0.000000e+00> : vector<1x48xf32>
    %62 = tpu.matmul %60, %61, %cst_37 {dimension_numbers = #tpu.dot_dimension_numbers<[1], [0], [0], [1], [0, 0, 1, 1], [], []>} : vector<1x32xf32>, vector<32x48xf32>, vector<1x48xf32> -> vector<1x48xf32>
    %63 = vector.extract_strided_slice %62 {offsets = [0, 0], sizes = [1, 16], strides = [1, 1]} : vector<1x48xf32> to vector<1x16xf32>
    %64 = arith.addf %63, %20 : vector<1x16xf32>
    %65 = vector.extract_strided_slice %62 {offsets = [0, 16], sizes = [1, 32], strides = [1, 1]} : vector<1x48xf32> to vector<1x32xf32>
    %c0_38 = arith.constant 0 : index
    %c0_39 = arith.constant 0 : index
    %66 = vector.load %arg5[%c0_38, %c0_39] : memref<32x6xf32, #tpu.memory_space<vmem>>, vector<32x6xf32>
    %cst_40 = arith.constant dense<0.000000e+00> : vector<1x6xf32>
    %67 = tpu.matmul %65, %66, %cst_40 {dimension_numbers = #tpu.dot_dimension_numbers<[1], [0], [0], [1], [0, 0, 1, 1], [], []>} : vector<1x32xf32>, vector<32x6xf32>, vector<1x6xf32> -> vector<1x6xf32>
    %cst_41 = arith.constant 0.000000e+00 : f32
    %68 = vector.broadcast %cst_41 : f32 to vector<1x34xf32>
    %69 = tpu.concatenate %64, %67, %57, %37, %68 in 1 : vector<1x16xf32>, vector<1x6xf32>, vector<1x64xf32>, vector<1x8xf32>, vector<1x34xf32> -> vector<1x128xf32>
    %c0_42 = arith.constant 0 : index
    %c0_43 = arith.constant 0 : index
    %c0_44 = arith.constant 0 : index
    %70 = vector.load %arg7[%c0_42, %c0_43, %c0_44] : memref<1x1x128xf32, #tpu.memory_space<vmem>>, vector<1x1x128xf32>
    %71 = vector.shape_cast %70 : vector<1x1x128xf32> to vector<1x128xf32>
    %72 = vector.shape_cast %69 : vector<1x128xf32> to vector<1x1x128xf32>
    tpu.vector_store %arg7[%c0_42, %c0_43, %c0_44], %72 {strides = array<i32>} : memref<1x1x128xf32, #tpu.memory_space<vmem>>, vector<1x1x128xf32>,
    return
  }
  func.func @transform_0(%arg0: i32) -> (i32, i32, i32) {
    %c0_i32 = arith.constant 0 : i32
    %c0_i32_0 = arith.constant 0 : i32
    %c0_i32_1 = arith.constant 0 : i32
    return %arg0, %c0_i32, %c0_i32_0 : i32, i32, i32
  }
  func.func @transform_1(%arg0: i32) -> (i32, i32, i32) {
    %c0_i32 = arith.constant 0 : i32
    %c0_i32_0 = arith.constant 0 : i32
    %c0_i32_1 = arith.constant 0 : i32
    return %arg0, %c0_i32, %c0_i32_0 : i32, i32, i32
  }
  func.func @transform_2(%arg0: i32) -> (i32, i32, i32) {
    %c0_i32 = arith.constant 0 : i32
    %c0_i32_0 = arith.constant 0 : i32
    %c0_i32_1 = arith.constant 0 : i32
    return %arg0, %c0_i32, %c0_i32_0 : i32, i32, i32
  }
  func.func @transform_3(%arg0: i32) -> (i32, i32) {
    %c0_i32 = arith.constant 0 : i32
    %c0_i32_0 = arith.constant 0 : i32
    %c0_i32_1 = arith.constant 0 : i32
    return %c0_i32, %c0_i32_0 : i32, i32
  }
  func.func @transform_4(%arg0: i32) -> (i32, i32) {
    %c0_i32 = arith.constant 0 : i32
    %c0_i32_0 = arith.constant 0 : i32
    %c0_i32_1 = arith.constant 0 : i32
    return %c0_i32, %c0_i32_0 : i32, i32
  }
  func.func @transform_5(%arg0: i32) -> (i32, i32) {
    %c0_i32 = arith.constant 0 : i32
    %c0_i32_0 = arith.constant 0 : i32
    %c0_i32_1 = arith.constant 0 : i32
    return %c0_i32, %c0_i32_0 : i32, i32
  }
  func.func @transform_6(%arg0: i32) -> (i32, i32, i32) {
    %c0_i32 = arith.constant 0 : i32
    %c0_i32_0 = arith.constant 0 : i32
    %c0_i32_1 = arith.constant 0 : i32
    return %arg0, %c0_i32, %c0_i32_0 : i32, i32, i32
  }
}

</mosaic_0001>

<llo_original>
// kernel: schema_token_predictor_forward.1
$region0: #{schema_token_predictor_forward.1}
  #allocation0 [shape = 'u32[]', space=smem, size = 0x4, offset = 0x4, fixed_abs, tag = 'smem constant byte address 0x4 - core index']
  #allocation1 [shape = 'u32[72,128]{1,0:T(1,128)}', space=vmem, size = 0x9000, scoped, tag = 'internal scratch']
  %s0 = inlined_call_operand.vmem [shape: f32[2,1,32], index: 0, kind: input, shape index: {}]
  %s1 = inlined_call_operand.vmem [shape: f32[2,8,32], index: 1, kind: input, shape index: {}]
  %s2 = inlined_call_operand.vmem [shape: s32[2,4,1], index: 2, kind: input, shape index: {}]
  %s3 = inlined_call_operand.vmem [shape: f32[10,32], index: 3, kind: input, shape index: {}]
  %s4 = inlined_call_operand.vmem [shape: f32[32,6], index: 4, kind: input, shape index: {}]
  %s5 = inlined_call_operand.hbm [shape: f32[104,128], index: 5, kind: input, shape index: {}]
  %s6 = inlined_call_operand.vmem [shape: f32[2,1,128], index: 6, kind: output, shape index: {}]
  %s7 = sld [smem:[#allocation0]]
  $region61: #{schema_token_predictor_forward.1} parent=0
    _
  %s9 = ssub.s32 1, %s7
  %s10 = scalar_select 0, %s9, %s7
  $region1: #{schema_token_predictor_forward.1} parent=0
    #allocation2 [shape = 'u8[53248]{0}', space=vmem, size = 0xd000, scoped, tag = 'input window, operand 5, single buffered']
    #allocation3 [shape = 's32[2]{0}', space=sflag, size = 0x8, scoped, tag = 'scoped memory for schema_token_predictor_forward.1']
    %11 = vsyncpa [#allocation3], 0
    loop: start=0, step=1, limit=4
    $region2: #{schema_token_predictor_forward.1} parent=1 // loop_pre_header
      _
    $region3: #{schema_token_predictor_forward.1} parent=1 // loop_header
      %s13 = sphi 0, %s17
      %p14 = scmp.ge.s32.totalorder %s13, 4
      %s23 = sphi 0, %s25
      %s26 = sphi 0, %s23
      %s27 = sphi 0, %s26
      %s43 = sphi 0, %s27
      %s49 = sphi 0, %s51
      %s52 = sphi 0, %s49
      %s53 = sphi 0, %s52
      %s69 = sphi 0, %s53
      %s75 = sphi 0, %s77
      %s78 = sphi 0, %s75
      %s79 = sphi 0, %s78
      %s95 = sphi 0, %s79
      %s99 = sphi 0, %s99
      %s101 = sphi 0, %s99
      %s102 = sphi 0, %s101
      %s116 = sphi 0, %s102
      %s120 = sphi 0, %s120
      %s122 = sphi 0, %s120
      %s123 = sphi 0, %s122
      %s137 = sphi 0, %s123
      %s141 = sphi 0, %s141
      %s143 = sphi 0, %s141
      %s144 = sphi 0, %s143
      %s158 = sphi 0, %s144
      %s164 = sphi 0, %s166
      %s167 = sphi 0, %s164
      %s168 = sphi 0, %s167
      %s184 = sphi 0, %s168
    $region4: #{schema_token_predictor_forward.1} parent=1 // loop_header_branch
      %16 = sbr.rel (%p14) target = $region8
    $region5: #{schema_token_predictor_forward.1} parent=1 // loop_body
      %s18 = ssub.s32 %s13, 1
      %s19 = ssub.s32 %s13, 2
      %s20 = sadd.s32 %s13, 1
      %s21 = ssub.s32 %s13, %s20
      %p22 = scmp.eq.s32.totalorder %s21, 0
      %s24 = sadd.s32 %s23, 1
      %s25 = scalar_select %p22, %s23, %s24
      %p28 = pneg %p22
      %p29 = scmp.eq.s32.totalorder %s13, 1
      %p30 = por %p28, %p29
      %p31 = scmp.ne.s32.totalorder %s23, %s26
      %p32 = scmp.eq.s32.totalorder %s13, 0
      %p33 = por %p31, %p32
      %p34 = scmp.ne.s32.totalorder %s23, %s26
      %p35 = scmp.eq.s32.totalorder %s18, 1
      %p36 = por %p34, %p35
      %p37 = scmp.ne.s32.totalorder %s26, %s27
      %p38 = scmp.eq.s32.totalorder %s18, 0
      %p39 = por %p37, %p38
      %p40 = scmp.ne.s32.totalorder %s26, %s27
      %p41 = scmp.eq.s32.totalorder %s19, 1
      %p42 = por %p40, %p41
      %p44 = scmp.ne.s32.totalorder %s27, %s43
      %p45 = scmp.eq.s32.totalorder %s19, 0
      %p46 = por %p44, %p45
      %s47 = ssub.s32 %s13, %s20
      %p48 = scmp.eq.s32.totalorder %s47, 0
      %s50 = sadd.s32 %s49, 1
      %s51 = scalar_select %p48, %s49, %s50
      %p54 = pneg %p48
      %p55 = scmp.eq.s32.totalorder %s13, 1
      %p56 = por %p54, %p55
      %p57 = scmp.ne.s32.totalorder %s49, %s52
      %p58 = scmp.eq.s32.totalorder %s13, 0
      %p59 = por %p57, %p58
      %p60 = scmp.ne.s32.totalorder %s49, %s52
      %p61 = scmp.eq.s32.totalorder %s18, 1
      %p62 = por %p60, %p61
      %p63 = scmp.ne.s32.totalorder %s52, %s53
      %p64 = scmp.eq.s32.totalorder %s18, 0
      %p65 = por %p63, %p64
      %p66 = scmp.ne.s32.totalorder %s52, %s53
      %p67 = scmp.eq.s32.totalorder %s19, 1
      %p68 = por %p66, %p67
      %p70 = scmp.ne.s32.totalorder %s53, %s69
      %p71 = scmp.eq.s32.totalorder %s19, 0
      %p72 = por %p70, %p71
      %s73 = ssub.s32 %s13, %s20
      %p74 = scmp.eq.s32.totalorder %s73, 0
      %s76 = sadd.s32 %s75, 1
      %s77 = scalar_select %p74, %s75, %s76
      %p80 = pneg %p74
      %p81 = scmp.eq.s32.totalorder %s13, 1
      %p82 = por %p80, %p81
      %p83 = scmp.ne.s32.totalorder %s75, %s78
      %p84 = scmp.eq.s32.totalorder %s13, 0
      %p85 = por %p83, %p84
      %p86 = scmp.ne.s32.totalorder %s75, %s78
      %p87 = scmp.eq.s32.totalorder %s18, 1
      %p88 = por %p86, %p87
      %p89 = scmp.ne.s32.totalorder %s78, %s79
      %p90 = scmp.eq.s32.totalorder %s18, 0
      %p91 = por %p89, %p90
      %p92 = scmp.ne.s32.totalorder %s78, %s79
      %p93 = scmp.eq.s32.totalorder %s19, 1
      %p94 = por %p92, %p93
      %p96 = scmp.ne.s32.totalorder %s79, %s95
      %p97 = scmp.eq.s32.totalorder %s19, 0
      %p98 = por %p96, %p97
      %s100 = sadd.s32 %s99, 1
      %p103 = scmp.eq.s32.totalorder %s13, 1
      %p104 = scmp.ne.s32.totalorder %s99, %s101
      %p105 = scmp.eq.s32.totalorder %s13, 0
      %p106 = por %p104, %p105
      %p107 = scmp.ne.s32.totalorder %s99, %s101
      %p108 = scmp.eq.s32.totalorder %s18, 1
      %p109 = por %p107, %p108
      %p110 = scmp.ne.s32.totalorder %s101, %s102
      %p111 = scmp.eq.s32.totalorder %s18, 0
      %p112 = por %p110, %p111
      %p113 = scmp.ne.s32.totalorder %s101, %s102
      %p114 = scmp.eq.s32.totalorder %s19, 1
      %p115 = por %p113, %p114
      %p117 = scmp.ne.s32.totalorder %s102, %s116
      %p118 = scmp.eq.s32.totalorder %s19, 0
      %p119 = por %p117, %p118
      %s121 = sadd.s32 %s120, 1
      %p124 = scmp.eq.s32.totalorder %s13, 1
      %p125 = scmp.ne.s32.totalorder %s120, %s122
      %p126 = scmp.eq.s32.totalorder %s13, 0
      %p127 = por %p125, %p126
      %p128 = scmp.ne.s32.totalorder %s120, %s122
      %p129 = scmp.eq.s32.totalorder %s18, 1
      %p130 = por %p128, %p129
      %p131 = scmp.ne.s32.totalorder %s122, %s123
      %p132 = scmp.eq.s32.totalorder %s18, 0
      %p133 = por %p131, %p132
      %p134 = scmp.ne.s32.totalorder %s122, %s123
      %p135 = scmp.eq.s32.totalorder %s19, 1
      %p136 = por %p134, %p135
      %p138 = scmp.ne.s32.totalorder %s123, %s137
      %p139 = scmp.eq.s32.totalorder %s19, 0
      %p140 = por %p138, %p139
      %s142 = sadd.s32 %s141, 1
      %p145 = scmp.eq.s32.totalorder %s13, 1
      %p146 = scmp.ne.s32.totalorder %s141, %s143
      %p147 = scmp.eq.s32.totalorder %s13, 0
      %p148 = por %p146, %p147
      %p149 = scmp.ne.s32.totalorder %s141, %s143
      %p150 = scmp.eq.s32.totalorder %s18, 1
      %p151 = por %p149, %p150
      %p152 = scmp.ne.s32.totalorder %s143, %s144
      %p153 = scmp.eq.s32.totalorder %s18, 0
      %p154 = por %p152, %p153
      %p155 = scmp.ne.s32.totalorder %s143, %s144
      %p156 = scmp.eq.s32.totalorder %s19, 1
      %p157 = por %p155, %p156
      %p159 = scmp.ne.s32.totalorder %s144, %s158
      %p160 = scmp.eq.s32.totalorder %s19, 0
      %p161 = por %p159, %p160
      %s162 = ssub.s32 %s13, %s20
      %p163 = scmp.eq.s32.totalorder %s162, 0
      %s165 = sadd.s32 %s164, 1
      %s166 = scalar_select %p163, %s164, %s165
      %p169 = pneg %p163
      %p170 = scmp.eq.s32.totalorder %s13, 1
      %p171 = por %p169, %p170
      %p172 = scmp.ne.s32.totalorder %s164, %s167
      %p173 = scmp.eq.s32.totalorder %s13, 0
      %p174 = por %p172, %p173
      %p175 = scmp.ne.s32.totalorder %s164, %s167
      %p176 = scmp.eq.s32.totalorder %s18, 1
      %p177 = por %p175, %p176
      %p178 = scmp.ne.s32.totalorder %s167, %s168
      %p179 = scmp.eq.s32.totalorder %s18, 0
      %p180 = por %p178, %p179
      %p181 = scmp.ne.s32.totalorder %s167, %s168
      %p182 = scmp.eq.s32.totalorder %s19, 1
      %p183 = por %p181, %p182
      %p185 = scmp.ne.s32.totalorder %s168, %s184
      %p186 = scmp.eq.s32.totalorder %s19, 0
      %p187 = por %p185, %p186
      %p188 = scmp.le.s32.totalorder 1, %s13
      %p189 = scmp.lt.s32.totalorder %s13, 3
      %p190 = pnand %p188, %p189
      %p191 = pneg %p190
      // Predicated region
      $region9: #{schema_token_predictor_forward.1} parent=5 // pred_check
        _
      $region10: #{schema_token_predictor_forward.1} parent=5 // pred_check_branch
        %193 = sbr.rel (%p190) target = $region12
      $region11: #{schema_token_predictor_forward.1} parent=5 // pred_region
        %s194 = ssub.s32 %s13, 1
        // Predicated region
        $region13: #{schema_token_predictor_forward.1} parent=11 // pred_check
          %p195 = pneg %p112
        $region14: #{schema_token_predictor_forward.1} parent=11 // pred_check_branch
          %197 = sbr.rel (%p195) target = $region16
        $region15: #{schema_token_predictor_forward.1} parent=11 // pred_region
          _
        $region16: #{schema_token_predictor_forward.1} parent=11 // pred_fallthru
          _
        // Predicated region
        $region17: #{schema_token_predictor_forward.1} parent=11 // pred_check
          %p198 = pneg %p133
        $region18: #{schema_token_predictor_forward.1} parent=11 // pred_check_branch
          %200 = sbr.rel (%p198) target = $region20
        $region19: #{schema_token_predictor_forward.1} parent=11 // pred_region
          _
        $region20: #{schema_token_predictor_forward.1} parent=11 // pred_fallthru
          _
        // Predicated region
        $region21: #{schema_token_predictor_forward.1} parent=11 // pred_check
          %p201 = pneg %p154
        $region22: #{schema_token_predictor_forward.1} parent=11 // pred_check_branch
          %203 = sbr.rel (%p201) target = $region24
        $region23: #{schema_token_predictor_forward.1} parent=11 // pred_region
          %205 = vsyncadd [#allocation3], 0
          %s206 = sshll.u32 %s5, 4
          %s207 = int_to_ptr.hbm [resolvable:$true] %s206
          %s208 = sshll.u32 [#allocation2], 4
          %s209 = int_to_ptr.vmem [resolvable:$true] %s208
          %214 = dma.hbm_to_vmem [thread:$0]  %s207, 1664, %s209, [#allocation3], 128, 128, 8
        $region24: #{schema_token_predictor_forward.1} parent=11 // pred_fallthru
          _
      $region12: #{schema_token_predictor_forward.1} parent=5 // pred_fallthru
        _
      %p215 = scmp.lt.s32.totalorder %s13, 2
      // Predicated region
      $region25: #{schema_token_predictor_forward.1} parent=5 // pred_check
        %p216 = pneg %p215
      $region26: #{schema_token_predictor_forward.1} parent=5 // pred_check_branch
        %218 = sbr.rel (%p216) target = $region28
      $region27: #{schema_token_predictor_forward.1} parent=5 // pred_region
        // Predicated region
        $region29: #{schema_token_predictor_forward.1} parent=27 // pred_check
          %p219 = pneg %p33
        $region30: #{schema_token_predictor_forward.1} parent=27 // pred_check_branch
          %221 = sbr.rel (%p219) target = $region32
        $region31: #{schema_token_predictor_forward.1} parent=27 // pred_region
          %p222 = scmp.lt.s32.totalorder %s13, 1
          %s223 = scalar_select %p222, %s13, 1
          %s224 = scalar_lea.vmem %s0, %s223
        $region32: #{schema_token_predictor_forward.1} parent=27 // pred_fallthru
          _
        // Predicated region
        $region33: #{schema_token_predictor_forward.1} parent=27 // pred_check
          %p225 = pneg %p59
        $region34: #{schema_token_predictor_forward.1} parent=27 // pred_check_branch
          %227 = sbr.rel (%p225) target = $region36
        $region35: #{schema_token_predictor_forward.1} parent=27 // pred_region
          %p228 = scmp.lt.s32.totalorder %s13, 1
          %s229 = scalar_select %p228, %s13, 1
          %s230 = smul.addr %s229, 8
          %s231 = scalar_lea.vmem %s1, %s230
        $region36: #{schema_token_predictor_forward.1} parent=27 // pred_fallthru
          _
        // Predicated region
        $region37: #{schema_token_predictor_forward.1} parent=27 // pred_check
          %p232 = pneg %p85
        $region38: #{schema_token_predictor_forward.1} parent=27 // pred_check_branch
          %234 = sbr.rel (%p232) target = $region40
        $region39: #{schema_token_predictor_forward.1} parent=27 // pred_region
          %p235 = scmp.lt.s32.totalorder %s13, 1
          %s236 = scalar_select %p235, %s13, 1
          %s237 = smul.addr %s236, 4
          %s238 = scalar_lea.vmem %s2, %s237
        $region40: #{schema_token_predictor_forward.1} parent=27 // pred_fallthru
          _
      $region28: #{schema_token_predictor_forward.1} parent=5 // pred_fallthru
        _
      %p239 = scmp.le.s32.totalorder 1, %s13
      %p240 = scmp.lt.s32.totalorder %s13, 3
      %p241 = pnand %p239, %p240
      %p242 = pneg %p241
      // Predicated region
      $region41: #{schema_token_predictor_forward.1} parent=5 // pred_check
        _
      $region42: #{schema_token_predictor_forward.1} parent=5 // pred_check_branch
        %244 = sbr.rel (%p241) target = $region44
      $region43: #{schema_token_predictor_forward.1} parent=5 // pred_region
        %s245 = ssub.s32 %s13, 1
        // Predicated region
        $region45: #{schema_token_predictor_forward.1} parent=43 // pred_check
          %p246 = pneg %p154
        $region46: #{schema_token_predictor_forward.1} parent=43 // pred_check_branch
          %248 = sbr.rel (%p246) target = $region48
        $region47: #{schema_token_predictor_forward.1} parent=43 // pred_region
          %250 = dma.done [#allocation3], 1664
        $region48: #{schema_token_predictor_forward.1} parent=43 // pred_fallthru
          _
        %p251 = scmp.lt.s32.totalorder %s18, 1
        %s252 = scalar_select %p251, %s18, 1
        %s253 = scalar_lea.vmem %s0, %s252
        %p254 = pneg %p39
        %p255 = pneg %p36
        %p256 = scmp.lt.s32.totalorder %s18, 1
        %s257 = scalar_select %p256, %s18, 1
        %s258 = smul.addr %s257, 8
        %s259 = scalar_lea.vmem %s1, %s258
        %p260 = pneg %p65
        %p261 = pneg %p62
        %p262 = scmp.lt.s32.totalorder %s18, 1
        %s263 = scalar_select %p262, %s18, 1
        %s264 = smul.addr %s263, 4
        %s265 = scalar_lea.vmem %s2, %s264
        %p266 = pneg %p91
        %p267 = pneg %p88
        %p268 = pneg %p112
        %p269 = pneg %p109
        %p270 = pneg %p133
        %p271 = pneg %p130
        %p272 = pneg %p154
        %p273 = pneg %p151
        %p274 = pneg %p180
        %p275 = pneg %p177
        %p276 = scmp.lt.s32.totalorder %s18, 1
        %s277 = scalar_select %p276, %s18, 1
        %s278 = scalar_lea.vmem %s6, %s277
        %p279 = scmp.lt.s32.totalorder %s18, 1
        %s280 = scalar_select %p279, %s18, 1
        %s281 = scalar_lea.vmem %s0, %s280
        %p282 = scmp.lt.s32.totalorder %s18, 1
        %s283 = scalar_select %p282, %s18, 1
        %s284 = smul.addr %s283, 8
        %s285 = scalar_lea.vmem %s1, %s284
        %p286 = scmp.lt.s32.totalorder %s18, 1
        %s287 = scalar_select %p286, %s18, 1
        %s288 = smul.addr %s287, 4
        %s289 = scalar_lea.vmem %s2, %s288
        %p290 = scmp.lt.s32.totalorder %s18, 1
        %s291 = scalar_select %p290, %s18, 1
        %s292 = scalar_lea.vmem %s6, %s291
        %v293 = vld [vmem:[%s281] sm:$0x1]
        %v294 = vld [vmem:[%s285] sm:$0xff]
        %v295 = vld [vmem:[%s289] sm:$0xf]
        %v296 = vld [vmem:[%s3] sm:$0xff]
        %v297 = vld [vmem:[%s3 + $0x8] sm:$0x3]
        %v298 = vlaneseq
        %v299 = vand.u32 %v298, 127
        %300 = vset.pattern.permute.xlu0 0
        %301 = vperm.xlu0 %300, %v295
        %v302 = vpop.permute.xlu0 %301
        %vm303 = vcmp.eq.s32.totalorder %v299, %v302
        %v304 = vsel %vm303, 1, 0
        %v305 = vcvt.s32.f32 %v304
        %vm306 = vcmask 80896
        %v308 = vsel %vm306, %v305, 0
        %vm310 = vcmask 1041408
        %v312 = vsel %vm310, %v297, 0
        %314 = vmatpush.msra.mxu0 0.0
        %315 = vmatpush.msra.mxu0 0.0
        %316 = vmatpush.msra.mxu0 0.0
        %317 = vmatpush.msra.mxu0 0.0
        %318 = vmatpush.msra.mxu0 0.0
        %319 = vmatpush.msra.mxu0 0.0
        %320 = vmatpush.msra.mxu0 0.0
        %321 = vmatpush.msra.mxu0 0.0
        %322 = vmatpush.msra.mxu0 0.0
        %323 = vmatpush.msra.mxu0 0.0
        %324 = vmatpush.msra.mxu0 0.0
        %325 = vmatpush.msra.mxu0 0.0
        %326 = vmatpush.msra.mxu0 0.0
        %327 = vmatpush.msra.mxu0 0.0
        %328 = vmatpush.msra.mxu0 %v312
        %329 = vmatpush.msra.mxu0 %v296
        %330 = vmatmul.f32.gmra.mxu0 %v308
        %v331 = vpop.f32.mrf.mxu0
        %v332 = vadd.f32 0.0, %v331
        %333 = vdwg.mxu0
        %v334 = vld [vmem:[#allocation2] sm:$0xff]
        %v335 = vld [vmem:[#allocation2 + $0x8] sm:$0xff]
        %v336 = vld [vmem:[#allocation2 + $0x10] sm:$0xff]
        %v337 = vld [vmem:[#allocation2 + $0x18] sm:$0xff]
        %vm338 = vcmask 261120
        %v340 = vsel %vm338, %v293, 0
        %342 = vmatpush.msra.mxu0 0.0
        %343 = vmatpush.msra.mxu0 0.0
        %344 = vmatpush.msra.mxu0 0.0
        %345 = vmatpush.msra.mxu0 0.0
        %346 = vmatpush.msra.mxu0 0.0
        %347 = vmatpush.msra.mxu0 0.0
        %348 = vmatpush.msra.mxu0 0.0
        %349 = vmatpush.msra.mxu0 0.0
        %350 = vmatpush.msra.mxu0 0.0
        %351 = vmatpush.msra.mxu0 0.0
        %352 = vmatpush.msra.mxu0 0.0
        %353 = vmatpush.msra.mxu0 0.0
        %354 = vmatpush.msra.mxu0 %v337
        %355 = vmatpush.msra.mxu0 %v336
        %356 = vmatpush.msra.mxu0 %v335
        %357 = vmatpush.msra.mxu0 %v334
        %358 = vmatmul.f32.gmra.mxu0 %v340
        %v359 = vpop.f32.mrf.mxu0
        %v360 = vadd.f32 0.0, %v359
        %361 = vdwg.mxu0
        %v362 = vld [vmem:[#allocation2 + $0x60] sm:$0x1]
        %367 = vrot.lane.b32.xlu0 %v334, 32
        %v368 = vpop.permute.xlu0 %367
        %369 = vrot.lane.b32.xlu0 %v335, 32
        %v370 = vpop.permute.xlu0 %369
        %371 = vrot.lane.b32.xlu0 %v336, 32
        %v372 = vpop.permute.xlu0 %371
        %373 = vrot.lane.b32.xlu0 %v337, 32
        %v374 = vpop.permute.xlu0 %373
        %v380 = vsel %vm338, %v294, 0
        %382 = vmatpush.msra.mxu0 0.0
        %383 = vmatpush.msra.mxu0 0.0
        %384 = vmatpush.msra.mxu0 0.0
        %385 = vmatpush.msra.mxu0 0.0
        %386 = vmatpush.msra.mxu0 0.0
        %387 = vmatpush.msra.mxu0 0.0
        %388 = vmatpush.msra.mxu0 0.0
        %389 = vmatpush.msra.mxu0 0.0
        %390 = vmatpush.msra.mxu0 0.0
        %391 = vmatpush.msra.mxu0 0.0
        %392 = vmatpush.msra.mxu0 0.0
        %393 = vmatpush.msra.mxu0 0.0
        %394 = vmatpush.msra.mxu0 %v374
        %395 = vmatpush.msra.mxu0 %v372
        %396 = vmatpush.msra.mxu0 %v370
        %397 = vmatpush.msra.mxu0 %v368
        %398 = vmatmul.f32.gmra.mxu0 %v380
        %v399 = vpop.f32.mrf.mxu0
        %v400 = vadd.f32 0.0, %v399
        %401 = vdwg.mxu0
        %v402 = vperm.slane %v360, 0
        %v403 = vadd.f32 %v402, %v400
        %v404 = vtanh.pop %v403
        %v406 = vsel %vm338, %v362, 0
        %v409 = vsel %vm338, %v404, 0
        %411 = vmatpush.xpose.msra.mxu0 0.0
        %412 = vmatpush.xpose.msra.mxu0 0.0
        %413 = vmatpush.xpose.msra.mxu0 0.0
        %414 = vmatpush.xpose.msra.mxu0 0.0
        %415 = vmatpush.xpose.msra.mxu0 0.0
        %416 = vmatpush.xpose.msra.mxu0 0.0
        %417 = vmatpush.xpose.msra.mxu0 0.0
        %418 = vmatpush.xpose.msra.mxu0 0.0
        %419 = vmatpush.xpose.msra.mxu0 0.0
        %420 = vmatpush.xpose.msra.mxu0 0.0
        %421 = vmatpush.xpose.msra.mxu0 0.0
        %422 = vmatpush.xpose.msra.mxu0 0.0
        %423 = vmatpush.xpose.msra.mxu0 0.0
        %424 = vmatpush.xpose.msra.mxu0 0.0
        %425 = vmatpush.xpose.msra.mxu0 0.0
        %426 = vmatpush.xpose.msra.mxu0 %v409
        %427 = vmatmul.f32.gmra.mxu0 %v406
        %v428 = vpop.f32.mrf.mxu0
        %v429 = vadd.f32 0.0, %v428
        %430 = vdwg.mxu0
        %vm431 = vcmask 57344
        %v432 = vsel %vm431, %v429, -inf
        %433 = vmax.xlane.f32.xlu0 %v432
        %v434 = vpop.xlane.xlu0 %433
        %v435 = vsub.f32 %v429, %v434
        %v436 = vmul.f32 %v435, 1.442695
        %v437 = vpow.pop %v436
        %v438 = vsel %vm431, %v437, 0.0
        %439 = vadd.xlane.f32.xlu0 %v438
        %v440 = vpop.xlane.xlu0 %439
        %v441 = vrcp.pop %v440
        %v442 = vmul.f32 %v440, %v441
        %v443 = vsub.f32 1.0, %v442
        %v444 = vmul.f32 %v441, %v443
        %v445 = vadd.f32 %v441, %v444
        %vm446 = vweird.f32 %v440
        %vm447 = vweird.f32 %v441
        %vm448 = vmor %vm446, %vm447
        %v449 = vsel %vm448, %v441, %v445
        %v450 = vand.u32 2147483647, %v440
        %vm451 = vcmp.eq.f32.partialorder %v450, 8.507059e+37
        %v452 = vand.u32 %v440, 2147483648
        %v453 = vor.u32 1.1754944e-38, %v452
        %v454 = vsel %vm451, %v453, %v449
        %v455 = vmul.f32 1.0, %v454
        %v456 = vmul.f32 %v437, %v455
        %vm457 = vcmask 64512
        %v459 = vsel %vm457, %v456, 0
        %461 = vmatpush.msra.mxu0 0.0
        %462 = vmatpush.msra.mxu0 0.0
        %463 = vmatpush.msra.mxu0 0.0
        %464 = vmatpush.msra.mxu0 0.0
        %465 = vmatpush.msra.mxu0 0.0
        %466 = vmatpush.msra.mxu0 0.0
        %467 = vmatpush.msra.mxu0 0.0
        %468 = vmatpush.msra.mxu0 0.0
        %469 = vmatpush.msra.mxu0 0.0
        %470 = vmatpush.msra.mxu0 0.0
        %471 = vmatpush.msra.mxu0 0.0
        %472 = vmatpush.msra.mxu0 0.0
        %473 = vmatpush.msra.mxu0 0.0
        %474 = vmatpush.msra.mxu0 0.0
        %475 = vmatpush.msra.mxu0 0.0
        %476 = vmatpush.msra.mxu0 %v294
        %477 = vmatmul.f32.gmra.mxu0 %v459
        %v478 = vpop.f32.mrf.mxu0
        %v479 = vadd.f32 0.0, %v478
        %480 = vdwg.mxu0
        %v481 = vld [vmem:[#allocation2 + $0x20] sm:$0xff]
        %v482 = vld [vmem:[#allocation2 + $0x28] sm:$0xff]
        %v483 = vld [vmem:[#allocation2 + $0x30] sm:$0xff]
        %v484 = vld [vmem:[#allocation2 + $0x38] sm:$0xff]
        %489 = vrot.lane.b32.xlu0 %v481, 96
        %v490 = vpop.permute.xlu0 %489
        %491 = vrot.lane.b32.xlu0 %v482, 96
        %v492 = vpop.permute.xlu0 %491
        %493 = vrot.lane.b32.xlu0 %v483, 96
        %v494 = vpop.permute.xlu0 %493
        %495 = vrot.lane.b32.xlu0 %v484, 96
        %v496 = vpop.permute.xlu0 %495
        %v502 = vsel %vm338, %v332, 0
        %504 = vmatpush.msra.mxu0 0.0
        %505 = vmatpush.msra.mxu0 0.0
        %506 = vmatpush.msra.mxu0 0.0
        %507 = vmatpush.msra.mxu0 0.0
        %508 = vmatpush.msra.mxu0 0.0
        %509 = vmatpush.msra.mxu0 0.0
        %510 = vmatpush.msra.mxu0 0.0
        %511 = vmatpush.msra.mxu0 0.0
        %512 = vmatpush.msra.mxu0 0.0
        %513 = vmatpush.msra.mxu0 0.0
        %514 = vmatpush.msra.mxu0 0.0
        %515 = vmatpush.msra.mxu0 0.0
        %516 = vmatpush.msra.mxu0 %v496
        %517 = vmatpush.msra.mxu0 %v494
        %518 = vmatpush.msra.mxu0 %v492
        %519 = vmatpush.msra.mxu0 %v490
        %520 = vmatmul.f32.gmra.mxu0 %v502
        %v521 = vpop.f32.mrf.mxu0
        %v522 = vadd.f32 0.0, %v521
        %523 = vdwg.mxu0
        %525 = vrot.lane.b32.xlu0 %v522, 32
        %v526 = vpop.permute.xlu0 %525
        %v528 = vadd.f32 %v402, %v526
        %v529 = vtanh.pop %v528
        %530 = vrot.lane.b32.xlu0 %v362, 96
        %v531 = vpop.permute.xlu0 %530
        %533 = vrot.lane.b32.xlu0 %v529, 96
        %v534 = vpop.permute.xlu0 %533
        %v535 = vsel %vm338, %v531, 0
        %v537 = vsel %vm338, %v534, 0
        %539 = vmatpush.xpose.msra.mxu0 0.0
        %540 = vmatpush.xpose.msra.mxu0 0.0
        %541 = vmatpush.xpose.msra.mxu0 0.0
        %542 = vmatpush.xpose.msra.mxu0 0.0
        %543 = vmatpush.xpose.msra.mxu0 0.0
        %544 = vmatpush.xpose.msra.mxu0 0.0
        %545 = vmatpush.xpose.msra.mxu0 0.0
        %546 = vmatpush.xpose.msra.mxu0 0.0
        %547 = vmatpush.xpose.msra.mxu0 0.0
        %548 = vmatpush.xpose.msra.mxu0 0.0
        %549 = vmatpush.xpose.msra.mxu0 0.0
        %550 = vmatpush.xpose.msra.mxu0 0.0
        %551 = vmatpush.xpose.msra.mxu0 0.0
        %552 = vmatpush.xpose.msra.mxu0 0.0
        %553 = vmatpush.xpose.msra.mxu0 0.0
        %554 = vmatpush.xpose.msra.mxu0 %v537
        %555 = vmatmul.f32.gmra.mxu0 %v535
        %v556 = vpop.f32.mrf.mxu0
        %v557 = vadd.f32 0.0, %v556
        %558 = vdwg.mxu0
        %vm559 = vcmask 24576
        %v560 = vsel %vm559, %v557, -inf
        %561 = vmax.xlane.f32.xlu0 %v560
        %v562 = vpop.xlane.xlu0 %561
        %v563 = vsub.f32 %v557, %v562
        %v564 = vmul.f32 %v563, 1.442695
        %v565 = vpow.pop %v564
        %v566 = vsel %vm559, %v565, 0.0
        %567 = vadd.xlane.f32.xlu0 %v566
        %v568 = vpop.xlane.xlu0 %567
        %v569 = vrcp.pop %v568
        %v570 = vmul.f32 %v568, %v569
        %v571 = vsub.f32 1.0, %v570
        %v572 = vmul.f32 %v569, %v571
        %v573 = vadd.f32 %v569, %v572
        %vm574 = vweird.f32 %v568
        %vm575 = vweird.f32 %v569
        %vm576 = vmor %vm574, %vm575
        %v577 = vsel %vm576, %v569, %v573
        %v578 = vand.u32 2147483647, %v568
        %vm579 = vcmp.eq.f32.partialorder %v578, 8.507059e+37
        %v580 = vand.u32 %v568, 2147483648
        %v581 = vor.u32 1.1754944e-38, %v580
        %v582 = vsel %vm579, %v581, %v577
        %v583 = vmul.f32 1.0, %v582
        %v584 = vmul.f32 %v565, %v583
        %vm585 = vcmask 31744
        %v587 = vsel %vm585, %v584, 0
        %vm589 = vcmask 1043456
        %v590 = vsel %vm589, %v332, 0
        %592 = vmatpush.msra.mxu0 0.0
        %593 = vmatpush.msra.mxu0 0.0
        %594 = vmatpush.msra.mxu0 0.0
        %595 = vmatpush.msra.mxu0 0.0
        %596 = vmatpush.msra.mxu0 0.0
        %597 = vmatpush.msra.mxu0 0.0
        %598 = vmatpush.msra.mxu0 0.0
        %599 = vmatpush.msra.mxu0 0.0
        %600 = vmatpush.msra.mxu0 0.0
        %601 = vmatpush.msra.mxu0 0.0
        %602 = vmatpush.msra.mxu0 0.0
        %603 = vmatpush.msra.mxu0 0.0
        %604 = vmatpush.msra.mxu0 0.0
        %605 = vmatpush.msra.mxu0 0.0
        %606 = vmatpush.msra.mxu0 0.0
        %607 = vmatpush.msra.mxu0 %v590
        %608 = vmatmul.f32.gmra.mxu0 %v587
        %v609 = vpop.f32.mrf.mxu0
        %v610 = vadd.f32 0.0, %v609
        %611 = vdwg.mxu0
        %613 = vrot.lane.b32.xlu0 %v610, 32
        %v614 = vpop.permute.xlu0 %613
        %v616 = vsel %vm338, %v479, %v614
        %v617 = vld [vmem:[#allocation2 + $0x20] sm:$0xff]
        %v618 = vld [vmem:[#allocation2 + $0x28] sm:$0xff]
        %v619 = vld [vmem:[#allocation2 + $0x30] sm:$0xff]
        %v620 = vld [vmem:[#allocation2 + $0x38] sm:$0xff]
        %v621 = vld [vmem:[#allocation2 + $0x40] sm:$0xff]
        %v622 = vld [vmem:[#allocation2 + $0x48] sm:$0xff]
        %v623 = vld [vmem:[#allocation2 + $0x50] sm:$0xff]
        %v624 = vld [vmem:[#allocation2 + $0x58] sm:$0xff]
        %vm625 = vcmask 523264
        %v627 = vsel %vm625, %v616, 0
        %629 = vmatpush.msra.mxu0 0.0
        %630 = vmatpush.msra.mxu0 0.0
        %631 = vmatpush.msra.mxu0 0.0
        %632 = vmatpush.msra.mxu0 0.0
        %633 = vmatpush.msra.mxu0 0.0
        %634 = vmatpush.msra.mxu0 0.0
        %635 = vmatpush.msra.mxu0 0.0
        %636 = vmatpush.msra.mxu0 0.0
        %637 = vmatpush.msra.mxu0 %v624
        %638 = vmatpush.msra.mxu0 %v623
        %639 = vmatpush.msra.mxu0 %v622
        %640 = vmatpush.msra.mxu0 %v621
        %641 = vmatpush.msra.mxu0 %v620
        %642 = vmatpush.msra.mxu0 %v619
        %643 = vmatpush.msra.mxu0 %v618
        %644 = vmatpush.msra.mxu0 %v617
        %645 = vmatmul.f32.gmra.mxu0 %v627
        %v646 = vpop.f32.mrf.mxu0
        %v647 = vadd.f32 0.0, %v646
        %648 = vdwg.mxu0
        %650 = vrot.lane.b32.xlu0 %v647, 64
        %v651 = vpop.permute.xlu0 %650
        %v653 = vadd.f32 %v360, %v651
        %655 = vrot.lane.b32.xlu0 %v653, 64
        %v656 = vpop.permute.xlu0 %655
        %657 = vrot.lane.b32.xlu0 %v481, 64
        %v658 = vpop.permute.xlu0 %657
        %659 = vrot.lane.b32.xlu0 %v482, 64
        %v660 = vpop.permute.xlu0 %659
        %661 = vrot.lane.b32.xlu0 %v483, 64
        %v662 = vpop.permute.xlu0 %661
        %663 = vrot.lane.b32.xlu0 %v484, 64
        %v664 = vpop.permute.xlu0 %663
        %v669 = vsel %vm338, %v656, 0
        %671 = vmatpush.msra.mxu0 0.0
        %672 = vmatpush.msra.mxu0 0.0
        %673 = vmatpush.msra.mxu0 0.0
        %674 = vmatpush.msra.mxu0 0.0
        %675 = vmatpush.msra.mxu0 0.0
        %676 = vmatpush.msra.mxu0 0.0
        %677 = vmatpush.msra.mxu0 0.0
        %678 = vmatpush.msra.mxu0 0.0
        %679 = vmatpush.msra.mxu0 0.0
        %680 = vmatpush.msra.mxu0 0.0
        %681 = vmatpush.msra.mxu0 0.0
        %682 = vmatpush.msra.mxu0 0.0
        %683 = vmatpush.msra.mxu0 %v664
        %684 = vmatpush.msra.mxu0 %v662
        %685 = vmatpush.msra.mxu0 %v660
        %686 = vmatpush.msra.mxu0 %v658
        %687 = vmatmul.f32.gmra.mxu0 %v669
        %v688 = vpop.f32.mrf.mxu0
        %v689 = vadd.f32 0.0, %v688
        %690 = vdwg.mxu0
        %691 = vrot.lane.b32.xlu0 %v362, 64
        %v692 = vpop.permute.xlu0 %691
        %v694 = vadd.f32 %v689, %v692
        %v695 = vld [vmem:[%s4] sm:$0xff]
        %v696 = vld [vmem:[%s4 + $0x8] sm:$0xff]
        %v697 = vld [vmem:[%s4 + $0x10] sm:$0xff]
        %v698 = vld [vmem:[%s4 + $0x18] sm:$0xff]
        %700 = vrot.lane.b32.xlu0 %v689, 112
        %v701 = vpop.permute.xlu0 %700
        %v702 = vsel %vm338, %v701, 0
        %704 = vmatpush.msra.mxu0 0.0
        %705 = vmatpush.msra.mxu0 0.0
        %706 = vmatpush.msra.mxu0 0.0
        %707 = vmatpush.msra.mxu0 0.0
        %708 = vmatpush.msra.mxu0 0.0
        %709 = vmatpush.msra.mxu0 0.0
        %710 = vmatpush.msra.mxu0 0.0
        %711 = vmatpush.msra.mxu0 0.0
        %712 = vmatpush.msra.mxu0 0.0
        %713 = vmatpush.msra.mxu0 0.0
        %714 = vmatpush.msra.mxu0 0.0
        %715 = vmatpush.msra.mxu0 0.0
        %716 = vmatpush.msra.mxu0 %v698
        %717 = vmatpush.msra.mxu0 %v697
        %718 = vmatpush.msra.mxu0 %v696
        %719 = vmatpush.msra.mxu0 %v695
        %720 = vmatmul.f32.gmra.mxu0 %v702
        %v721 = vpop.f32.mrf.mxu0
        %v722 = vadd.f32 0.0, %v721
        %723 = vdwg.mxu0
        %725 = vrot.lane.b32.xlu0 %v722, 16
        %v726 = vpop.permute.xlu0 %725
        %728 = vrot.lane.b32.xlu0 %v616, 22
        %v729 = vpop.permute.xlu0 %728
        %731 = vrot.lane.b32.xlu0 %v456, 86
        %v732 = vpop.permute.xlu0 %731
        %vm734 = vcmask 130048
        %v735 = vsel %vm734, %v694, %v726
        %vm736 = vcmask 179200
        %v737 = vsel %vm736, %v735, %v729
        %vm738 = vcmask 703488
        %v739 = vsel %vm738, %v737, %v732
        %vm740 = vcmask 769024
        %v741 = vsel %vm740, %v739, 0.0
        %742 = vst [vmem:[%s292] sm:$0x1] %v741
        %p743 = scmp.lt.s32.totalorder %s18, 1
        %s744 = scalar_select %p743, %s18, 1
        %s745 = scalar_lea.vmem %s6, %s744
        // Predicated region
        $region49: #{schema_token_predictor_forward.1} parent=43 // pred_check
          %p746 = pneg %p177
        $region50: #{schema_token_predictor_forward.1} parent=43 // pred_check_branch
          %748 = sbr.rel (%p746) target = $region52
        $region51: #{schema_token_predictor_forward.1} parent=43 // pred_region
          _
        $region52: #{schema_token_predictor_forward.1} parent=43 // pred_fallthru
          _
      $region44: #{schema_token_predictor_forward.1} parent=5 // pred_fallthru
        _
      %p749 = scmp.le.s32.totalorder 2, %s13
      // Predicated region
      $region53: #{schema_token_predictor_forward.1} parent=5 // pred_check
        %p750 = pneg %p749
      $region54: #{schema_token_predictor_forward.1} parent=5 // pred_check_branch
        %752 = sbr.rel (%p750) target = $region56
      $region55: #{schema_token_predictor_forward.1} parent=5 // pred_region
        %s753 = ssub.s32 %s13, 2
        // Predicated region
        $region57: #{schema_token_predictor_forward.1} parent=55 // pred_check
          %p754 = pneg %p183
        $region58: #{schema_token_predictor_forward.1} parent=55 // pred_check_branch
          %756 = sbr.rel (%p754) target = $region60
        $region59: #{schema_token_predictor_forward.1} parent=55 // pred_region
          %p757 = scmp.lt.s32.totalorder %s19, 1
          %s758 = scalar_select %p757, %s19, 1
          %s759 = scalar_lea.vmem %s6, %s758
        $region60: #{schema_token_predictor_forward.1} parent=55 // pred_fallthru
          _
      $region56: #{schema_token_predictor_forward.1} parent=5 // pred_fallthru
        _
    $region6: #{schema_token_predictor_forward.1} parent=1 // loop_footer
      %s17 = sadd.s32 1, %s13
    $region7: #{schema_token_predictor_forward.1} parent=1 // loop_footer_branch
      %12 = sbr.rel target = $region3
    $region8: #{schema_token_predictor_forward.1} parent=1 // loop_exit
      _
    %760 = vsyncpa [#allocation3], 1
    %s761 = scalar_lea.sflag [#allocation3], 1
    %762 = vsyncpa %s761, 1

</llo_original>
